<compile_context>
chip_gen: v7x
topology: tpu7x:2x2x1
jax: 0.10.0
libtpu: 0.0.40
codegen_flags: <defaults>
</compile_context>

<pallas_src>
import jax
import jax.numpy as jnp
from jax.experimental import pallas as pl
from jax.experimental.pallas import tpu as pltpu

TOK_TILE = 8   # tokens gathered per grid step (sublane-aligned output tile)


def _embedding_gather_kernel(ids_ref,      # (n_pad,) int32 in SMEM (scalar prefetch)
                             table_ref,    # (V, D) embedding table, raw HBM ref (pl.ANY)
                             out_ref,      # (TOK_TILE, D) f32 VMEM output block
                             row_buf,      # (TOK_TILE, D) table-dtype VMEM scratch
                             sems):        # (TOK_TILE,) DMA semaphores
    base = pl.program_id(0) * TOK_TILE

    # Issue all row gathers for this token tile as parallel DMAs, then wait.
    copies = []
    for j in range(TOK_TILE):                       # static unroll
        row = ids_ref[base + j]                     # data-dependent row index (SMEM)
        cp = pltpu.make_async_copy(table_ref.at[pl.ds(row, 1), :],
                                   row_buf.at[pl.ds(j, 1), :],
                                   sems.at[j])
        cp.start()
        copies.append(cp)
    for cp in copies:
        cp.wait()

    # Lane-dense (8, D) store; bf16 -> f32 cast (res.float()) fused here when needed.
    out_ref[...] = row_buf[...].astype(out_ref.dtype)


def embedding_forward(embed_table, input_ids, using_bf16=False):
    """Pallas equivalent of Embedding.forward: gather -> (optional f32 cast) -> view(-1, 1, D)."""
    if using_bf16:
        embed_table = embed_table.astype(jnp.bfloat16)
    V, D = embed_table.shape
    assert D % 128 == 0, "embed_dim should be lane-dense (multiple of 128)"

    ids = input_ids.reshape(-1).astype(jnp.int32)
    n = ids.shape[0]
    n_pad = pl.cdiv(n, TOK_TILE) * TOK_TILE
    ids_pad = jnp.pad(ids, (0, n_pad - n))          # pad with row 0 (always a valid index)

    out = pl.pallas_call(
        _embedding_gather_kernel,
        out_shape=jax.ShapeDtypeStruct((n_pad, D), jnp.float32),
        grid_spec=pltpu.PrefetchScalarGridSpec(
            num_scalar_prefetch=1,
            grid=(n_pad // TOK_TILE,),
            in_specs=[pl.BlockSpec(memory_space=pl.ANY)],          # table stays in HBM
            out_specs=pl.BlockSpec((TOK_TILE, D), lambda t, ids_ref: (t, 0)),
            scratch_shapes=[pltpu.VMEM((TOK_TILE, D), embed_table.dtype),
                            pltpu.SemaphoreType.DMA((TOK_TILE,))],
        ),
        compiler_params=pltpu.CompilerParams(
            dimension_semantics=("parallel",)),      # v7x: split token tiles across TCs
    )(ids_pad, embed_table)

    # Matches `res.view(-1, 1, embed_dim)` (the f32 cast was fused into the kernel store).
    return out[:n].reshape(-1, 1, D)


if __name__ == "__main__":
    VOCAB, EMBED_DIM, SEQ = 512, 256, 16

    key = jax.random.PRNGKey(0)
    k_tab, k_ids = jax.random.split(key)
    table = jax.random.normal(k_tab, (VOCAB, EMBED_DIM), jnp.float32) * 0.02
    input_ids = jax.random.randint(k_ids, (SEQ,), 0, VOCAB, dtype=jnp.int32)

    # using_bf16=False path (f32 table, f32 output)
    out_f32 = embedding_forward(table, input_ids, using_bf16=False)
    # using_bf16=True path (bf16 gather, f32 output — matches `res.float()`)
    out_bf16 = embedding_forward(table, input_ids, using_bf16=True)
    jax.block_until_ready((out_f32, out_bf16))

    # Pure-JAX references
    ref_f32 = table[input_ids].reshape(-1, 1, EMBED_DIM)
    ref_bf16 = table.astype(jnp.bfloat16)[input_ids].astype(jnp.float32).reshape(-1, 1, EMBED_DIM)

    assert out_f32.shape == (SEQ, 1, EMBED_DIM)
    assert out_bf16.shape == (SEQ, 1, EMBED_DIM)
    assert bool(jnp.all(out_f32 == ref_f32))
    assert bool(jnp.all(out_bf16 == ref_bf16))
    print("KERNEL_OK")
</pallas_src>

<mosaic_0001>
module attributes {stable_mosaic.version = 11 : i64} {
  func.func @_embedding_gather_kernel(%arg0: i32, %arg1: memref<16xi32, #tpu.memory_space<smem>>, %arg2: memref<512x256xf32, #tpu.memory_space<any>>, %arg3: memref<8x256xf32, #tpu.memory_space<vmem>>, %arg4: memref<8x256xf32, #tpu.memory_space<vmem>>, %arg5: memref<8x!tpu.dma_semaphore, #tpu.memory_space<semaphore_mem>>) attributes {dimension_semantics = [#tpu.dimension_semantics<parallel>], iteration_bounds = array<i64: 2>, scalar_prefetch = 1 : i64, scratch_operands = 2 : i64, tpu.core_type = #tpu.core_type<tc>, window_params = [{}, {transform_indices = @transform_1, window_bounds = array<i64: 8, 256>}]} {
    %c8_i32 = arith.constant 8 : i32
    %0 = arith.muli %arg0, %c8_i32 : i32
    %c0_i32 = arith.constant 0 : i32
    %1 = arith.addi %0, %c0_i32 : i32
    %2 = arith.index_cast %1 : i32 to index
    %3 = memref.load %arg1[%2] : memref<16xi32, #tpu.memory_space<smem>>
    %c0_i32_0 = arith.constant 0 : i32
    %c0_i32_1 = arith.constant 0 : i32
    %4 = tpu.memref_slice %arg2[%3, %c0_i32_1] : memref<512x256xf32, #tpu.memory_space<any>> -> memref<1x256xf32, #tpu.memory_space<any>>
    %c0_i32_2 = arith.constant 0 : i32
    %c0_i32_3 = arith.constant 0 : i32
    %5 = tpu.memref_slice %arg4[%c0_i32_2, %c0_i32_3] : memref<8x256xf32, #tpu.memory_space<vmem>> -> memref<1x256xf32, #tpu.memory_space<vmem>>
    %6 = tpu.memref_slice %arg5[%c0_i32_0] : memref<8x!tpu.dma_semaphore, #tpu.memory_space<semaphore_mem>> -> memref<1x!tpu.dma_semaphore, #tpu.memory_space<semaphore_mem>>
    %7 = tpu.memref_squeeze %6 : memref<1x!tpu.dma_semaphore, #tpu.memory_space<semaphore_mem>> -> memref<!tpu.dma_semaphore, #tpu.memory_space<semaphore_mem>>
    tpu.enqueue_dma source(%4 : memref<1x256xf32, #tpu.memory_space<any>>) target(%5 : memref<1x256xf32, #tpu.memory_space<vmem>>) target_semaphore(%7 : memref<!tpu.dma_semaphore, #tpu.memory_space<semaphore_mem>>)
    %c1_i32 = arith.constant 1 : i32
    %8 = arith.addi %0, %c1_i32 : i32
    %9 = arith.index_cast %8 : i32 to index
    %10 = memref.load %arg1[%9] : memref<16xi32, #tpu.memory_space<smem>>
    %c1_i32_4 = arith.constant 1 : i32
    %c0_i32_5 = arith.constant 0 : i32
    %11 = tpu.memref_slice %arg2[%10, %c0_i32_5] : memref<512x256xf32, #tpu.memory_space<any>> -> memref<1x256xf32, #tpu.memory_space<any>>
    %c1_i32_6 = arith.constant 1 : i32
    %c0_i32_7 = arith.constant 0 : i32
    %12 = tpu.memref_slice %arg4[%c1_i32_6, %c0_i32_7] : memref<8x256xf32, #tpu.memory_space<vmem>> -> memref<1x256xf32, #tpu.memory_space<vmem>>
    %13 = tpu.memref_slice %arg5[%c1_i32_4] : memref<8x!tpu.dma_semaphore, #tpu.memory_space<semaphore_mem>> -> memref<1x!tpu.dma_semaphore, #tpu.memory_space<semaphore_mem>>
    %14 = tpu.memref_squeeze %13 : memref<1x!tpu.dma_semaphore, #tpu.memory_space<semaphore_mem>> -> memref<!tpu.dma_semaphore, #tpu.memory_space<semaphore_mem>>
    tpu.enqueue_dma source(%11 : memref<1x256xf32, #tpu.memory_space<any>>) target(%12 : memref<1x256xf32, #tpu.memory_space<vmem>>) target_semaphore(%14 : memref<!tpu.dma_semaphore, #tpu.memory_space<semaphore_mem>>)
    %c2_i32 = arith.constant 2 : i32
    %15 = arith.addi %0, %c2_i32 : i32
    %16 = arith.index_cast %15 : i32 to index
    %17 = memref.load %arg1[%16] : memref<16xi32, #tpu.memory_space<smem>>
    %c2_i32_8 = arith.constant 2 : i32
    %c0_i32_9 = arith.constant 0 : i32
    %18 = tpu.memref_slice %arg2[%17, %c0_i32_9] : memref<512x256xf32, #tpu.memory_space<any>> -> memref<1x256xf32, #tpu.memory_space<any>>
    %c2_i32_10 = arith.constant 2 : i32
    %c0_i32_11 = arith.constant 0 : i32
    %19 = tpu.memref_slice %arg4[%c2_i32_10, %c0_i32_11] : memref<8x256xf32, #tpu.memory_space<vmem>> -> memref<1x256xf32, #tpu.memory_space<vmem>>
    %20 = tpu.memref_slice %arg5[%c2_i32_8] : memref<8x!tpu.dma_semaphore, #tpu.memory_space<semaphore_mem>> -> memref<1x!tpu.dma_semaphore, #tpu.memory_space<semaphore_mem>>
    %21 = tpu.memref_squeeze %20 : memref<1x!tpu.dma_semaphore, #tpu.memory_space<semaphore_mem>> -> memref<!tpu.dma_semaphore, #tpu.memory_space<semaphore_mem>>
    tpu.enqueue_dma source(%18 : memref<1x256xf32, #tpu.memory_space<any>>) target(%19 : memref<1x256xf32, #tpu.memory_space<vmem>>) target_semaphore(%21 : memref<!tpu.dma_semaphore, #tpu.memory_space<semaphore_mem>>)
    %c3_i32 = arith.constant 3 : i32
    %22 = arith.addi %0, %c3_i32 : i32
    %23 = arith.index_cast %22 : i32 to index
    %24 = memref.load %arg1[%23] : memref<16xi32, #tpu.memory_space<smem>>
    %c3_i32_12 = arith.constant 3 : i32
    %c0_i32_13 = arith.constant 0 : i32
    %25 = tpu.memref_slice %arg2[%24, %c0_i32_13] : memref<512x256xf32, #tpu.memory_space<any>> -> memref<1x256xf32, #tpu.memory_space<any>>
    %c3_i32_14 = arith.constant 3 : i32
    %c0_i32_15 = arith.constant 0 : i32
    %26 = tpu.memref_slice %arg4[%c3_i32_14, %c0_i32_15] : memref<8x256xf32, #tpu.memory_space<vmem>> -> memref<1x256xf32, #tpu.memory_space<vmem>>
    %27 = tpu.memref_slice %arg5[%c3_i32_12] : memref<8x!tpu.dma_semaphore, #tpu.memory_space<semaphore_mem>> -> memref<1x!tpu.dma_semaphore, #tpu.memory_space<semaphore_mem>>
    %28 = tpu.memref_squeeze %27 : memref<1x!tpu.dma_semaphore, #tpu.memory_space<semaphore_mem>> -> memref<!tpu.dma_semaphore, #tpu.memory_space<semaphore_mem>>
    tpu.enqueue_dma source(%25 : memref<1x256xf32, #tpu.memory_space<any>>) target(%26 : memref<1x256xf32, #tpu.memory_space<vmem>>) target_semaphore(%28 : memref<!tpu.dma_semaphore, #tpu.memory_space<semaphore_mem>>)
    %c4_i32 = arith.constant 4 : i32
    %29 = arith.addi %0, %c4_i32 : i32
    %30 = arith.index_cast %29 : i32 to index
    %31 = memref.load %arg1[%30] : memref<16xi32, #tpu.memory_space<smem>>
    %c4_i32_16 = arith.constant 4 : i32
    %c0_i32_17 = arith.constant 0 : i32
    %32 = tpu.memref_slice %arg2[%31, %c0_i32_17] : memref<512x256xf32, #tpu.memory_space<any>> -> memref<1x256xf32, #tpu.memory_space<any>>
    %c4_i32_18 = arith.constant 4 : i32
    %c0_i32_19 = arith.constant 0 : i32
    %33 = tpu.memref_slice %arg4[%c4_i32_18, %c0_i32_19] : memref<8x256xf32, #tpu.memory_space<vmem>> -> memref<1x256xf32, #tpu.memory_space<vmem>>
    %34 = tpu.memref_slice %arg5[%c4_i32_16] : memref<8x!tpu.dma_semaphore, #tpu.memory_space<semaphore_mem>> -> memref<1x!tpu.dma_semaphore, #tpu.memory_space<semaphore_mem>>
    %35 = tpu.memref_squeeze %34 : memref<1x!tpu.dma_semaphore, #tpu.memory_space<semaphore_mem>> -> memref<!tpu.dma_semaphore, #tpu.memory_space<semaphore_mem>>
    tpu.enqueue_dma source(%32 : memref<1x256xf32, #tpu.memory_space<any>>) target(%33 : memref<1x256xf32, #tpu.memory_space<vmem>>) target_semaphore(%35 : memref<!tpu.dma_semaphore, #tpu.memory_space<semaphore_mem>>)
    %c5_i32 = arith.constant 5 : i32
    %36 = arith.addi %0, %c5_i32 : i32
    %37 = arith.index_cast %36 : i32 to index
    %38 = memref.load %arg1[%37] : memref<16xi32, #tpu.memory_space<smem>>
    %c5_i32_20 = arith.constant 5 : i32
    %c0_i32_21 = arith.constant 0 : i32
    %39 = tpu.memref_slice %arg2[%38, %c0_i32_21] : memref<512x256xf32, #tpu.memory_space<any>> -> memref<1x256xf32, #tpu.memory_space<any>>
    %c5_i32_22 = arith.constant 5 : i32
    %c0_i32_23 = arith.constant 0 : i32
    %40 = tpu.memref_slice %arg4[%c5_i32_22, %c0_i32_23] : memref<8x256xf32, #tpu.memory_space<vmem>> -> memref<1x256xf32, #tpu.memory_space<vmem>>
    %41 = tpu.memref_slice %arg5[%c5_i32_20] : memref<8x!tpu.dma_semaphore, #tpu.memory_space<semaphore_mem>> -> memref<1x!tpu.dma_semaphore, #tpu.memory_space<semaphore_mem>>
    %42 = tpu.memref_squeeze %41 : memref<1x!tpu.dma_semaphore, #tpu.memory_space<semaphore_mem>> -> memref<!tpu.dma_semaphore, #tpu.memory_space<semaphore_mem>>
    tpu.enqueue_dma source(%39 : memref<1x256xf32, #tpu.memory_space<any>>) target(%40 : memref<1x256xf32, #tpu.memory_space<vmem>>) target_semaphore(%42 : memref<!tpu.dma_semaphore, #tpu.memory_space<semaphore_mem>>)
    %c6_i32 = arith.constant 6 : i32
    %43 = arith.addi %0, %c6_i32 : i32
    %44 = arith.index_cast %43 : i32 to index
    %45 = memref.load %arg1[%44] : memref<16xi32, #tpu.memory_space<smem>>
    %c6_i32_24 = arith.constant 6 : i32
    %c0_i32_25 = arith.constant 0 : i32
    %46 = tpu.memref_slice %arg2[%45, %c0_i32_25] : memref<512x256xf32, #tpu.memory_space<any>> -> memref<1x256xf32, #tpu.memory_space<any>>
    %c6_i32_26 = arith.constant 6 : i32
    %c0_i32_27 = arith.constant 0 : i32
    %47 = tpu.memref_slice %arg4[%c6_i32_26, %c0_i32_27] : memref<8x256xf32, #tpu.memory_space<vmem>> -> memref<1x256xf32, #tpu.memory_space<vmem>>
    %48 = tpu.memref_slice %arg5[%c6_i32_24] : memref<8x!tpu.dma_semaphore, #tpu.memory_space<semaphore_mem>> -> memref<1x!tpu.dma_semaphore, #tpu.memory_space<semaphore_mem>>
    %49 = tpu.memref_squeeze %48 : memref<1x!tpu.dma_semaphore, #tpu.memory_space<semaphore_mem>> -> memref<!tpu.dma_semaphore, #tpu.memory_space<semaphore_mem>>
    tpu.enqueue_dma source(%46 : memref<1x256xf32, #tpu.memory_space<any>>) target(%47 : memref<1x256xf32, #tpu.memory_space<vmem>>) target_semaphore(%49 : memref<!tpu.dma_semaphore, #tpu.memory_space<semaphore_mem>>)
    %c7_i32 = arith.constant 7 : i32
    %50 = arith.addi %0, %c7_i32 : i32
    %51 = arith.index_cast %50 : i32 to index
    %52 = memref.load %arg1[%51] : memref<16xi32, #tpu.memory_space<smem>>
    %c7_i32_28 = arith.constant 7 : i32
    %c0_i32_29 = arith.constant 0 : i32
    %53 = tpu.memref_slice %arg2[%52, %c0_i32_29] : memref<512x256xf32, #tpu.memory_space<any>> -> memref<1x256xf32, #tpu.memory_space<any>>
    %c7_i32_30 = arith.constant 7 : i32
    %c0_i32_31 = arith.constant 0 : i32
    %54 = tpu.memref_slice %arg4[%c7_i32_30, %c0_i32_31] : memref<8x256xf32, #tpu.memory_space<vmem>> -> memref<1x256xf32, #tpu.memory_space<vmem>>
    %55 = tpu.memref_slice %arg5[%c7_i32_28] : memref<8x!tpu.dma_semaphore, #tpu.memory_space<semaphore_mem>> -> memref<1x!tpu.dma_semaphore, #tpu.memory_space<semaphore_mem>>
    %56 = tpu.memref_squeeze %55 : memref<1x!tpu.dma_semaphore, #tpu.memory_space<semaphore_mem>> -> memref<!tpu.dma_semaphore, #tpu.memory_space<semaphore_mem>>
    tpu.enqueue_dma source(%53 : memref<1x256xf32, #tpu.memory_space<any>>) target(%54 : memref<1x256xf32, #tpu.memory_space<vmem>>) target_semaphore(%56 : memref<!tpu.dma_semaphore, #tpu.memory_space<semaphore_mem>>)
    %c0_i32_32 = arith.constant 0 : i32
    %c0_i32_33 = arith.constant 0 : i32
    %57 = tpu.memref_slice %arg2[%3, %c0_i32_33] : memref<512x256xf32, #tpu.memory_space<any>> -> memref<1x256xf32, #tpu.memory_space<any>>
    %c0_i32_34 = arith.constant 0 : i32
    %c0_i32_35 = arith.constant 0 : i32
    %58 = tpu.memref_slice %arg4[%c0_i32_34, %c0_i32_35] : memref<8x256xf32, #tpu.memory_space<vmem>> -> memref<1x256xf32, #tpu.memory_space<vmem>>
    %59 = tpu.memref_slice %arg5[%c0_i32_32] : memref<8x!tpu.dma_semaphore, #tpu.memory_space<semaphore_mem>> -> memref<1x!tpu.dma_semaphore, #tpu.memory_space<semaphore_mem>>
    %60 = tpu.memref_squeeze %59 : memref<1x!tpu.dma_semaphore, #tpu.memory_space<semaphore_mem>> -> memref<!tpu.dma_semaphore, #tpu.memory_space<semaphore_mem>>
    tpu.wait_dma2 semaphore(%60 : memref<!tpu.dma_semaphore, #tpu.memory_space<semaphore_mem>>) src(%57 : memref<1x256xf32, #tpu.memory_space<any>>) dst(%58 : memref<1x256xf32, #tpu.memory_space<vmem>>)
    %c1_i32_36 = arith.constant 1 : i32
    %c0_i32_37 = arith.constant 0 : i32
    %61 = tpu.memref_slice %arg2[%10, %c0_i32_37] : memref<512x256xf32, #tpu.memory_space<any>> -> memref<1x256xf32, #tpu.memory_space<any>>
    %c1_i32_38 = arith.constant 1 : i32
    %c0_i32_39 = arith.constant 0 : i32
    %62 = tpu.memref_slice %arg4[%c1_i32_38, %c0_i32_39] : memref<8x256xf32, #tpu.memory_space<vmem>> -> memref<1x256xf32, #tpu.memory_space<vmem>>
    %63 = tpu.memref_slice %arg5[%c1_i32_36] : memref<8x!tpu.dma_semaphore, #tpu.memory_space<semaphore_mem>> -> memref<1x!tpu.dma_semaphore, #tpu.memory_space<semaphore_mem>>
    %64 = tpu.memref_squeeze %63 : memref<1x!tpu.dma_semaphore, #tpu.memory_space<semaphore_mem>> -> memref<!tpu.dma_semaphore, #tpu.memory_space<semaphore_mem>>
    tpu.wait_dma2 semaphore(%64 : memref<!tpu.dma_semaphore, #tpu.memory_space<semaphore_mem>>) src(%61 : memref<1x256xf32, #tpu.memory_space<any>>) dst(%62 : memref<1x256xf32, #tpu.memory_space<vmem>>)
    %c2_i32_40 = arith.constant 2 : i32
    %c0_i32_41 = arith.constant 0 : i32
    %65 = tpu.memref_slice %arg2[%17, %c0_i32_41] : memref<512x256xf32, #tpu.memory_space<any>> -> memref<1x256xf32, #tpu.memory_space<any>>
    %c2_i32_42 = arith.constant 2 : i32
    %c0_i32_43 = arith.constant 0 : i32
    %66 = tpu.memref_slice %arg4[%c2_i32_42, %c0_i32_43] : memref<8x256xf32, #tpu.memory_space<vmem>> -> memref<1x256xf32, #tpu.memory_space<vmem>>
    %67 = tpu.memref_slice %arg5[%c2_i32_40] : memref<8x!tpu.dma_semaphore, #tpu.memory_space<semaphore_mem>> -> memref<1x!tpu.dma_semaphore, #tpu.memory_space<semaphore_mem>>
    %68 = tpu.memref_squeeze %67 : memref<1x!tpu.dma_semaphore, #tpu.memory_space<semaphore_mem>> -> memref<!tpu.dma_semaphore, #tpu.memory_space<semaphore_mem>>
    tpu.wait_dma2 semaphore(%68 : memref<!tpu.dma_semaphore, #tpu.memory_space<semaphore_mem>>) src(%65 : memref<1x256xf32, #tpu.memory_space<any>>) dst(%66 : memref<1x256xf32, #tpu.memory_space<vmem>>)
    %c3_i32_44 = arith.constant 3 : i32
    %c0_i32_45 = arith.constant 0 : i32
    %69 = tpu.memref_slice %arg2[%24, %c0_i32_45] : memref<512x256xf32, #tpu.memory_space<any>> -> memref<1x256xf32, #tpu.memory_space<any>>
    %c3_i32_46 = arith.constant 3 : i32
    %c0_i32_47 = arith.constant 0 : i32
    %70 = tpu.memref_slice %arg4[%c3_i32_46, %c0_i32_47] : memref<8x256xf32, #tpu.memory_space<vmem>> -> memref<1x256xf32, #tpu.memory_space<vmem>>
    %71 = tpu.memref_slice %arg5[%c3_i32_44] : memref<8x!tpu.dma_semaphore, #tpu.memory_space<semaphore_mem>> -> memref<1x!tpu.dma_semaphore, #tpu.memory_space<semaphore_mem>>
    %72 = tpu.memref_squeeze %71 : memref<1x!tpu.dma_semaphore, #tpu.memory_space<semaphore_mem>> -> memref<!tpu.dma_semaphore, #tpu.memory_space<semaphore_mem>>
    tpu.wait_dma2 semaphore(%72 : memref<!tpu.dma_semaphore, #tpu.memory_space<semaphore_mem>>) src(%69 : memref<1x256xf32, #tpu.memory_space<any>>) dst(%70 : memref<1x256xf32, #tpu.memory_space<vmem>>)
    %c4_i32_48 = arith.constant 4 : i32
    %c0_i32_49 = arith.constant 0 : i32
    %73 = tpu.memref_slice %arg2[%31, %c0_i32_49] : memref<512x256xf32, #tpu.memory_space<any>> -> memref<1x256xf32, #tpu.memory_space<any>>
    %c4_i32_50 = arith.constant 4 : i32
    %c0_i32_51 = arith.constant 0 : i32
    %74 = tpu.memref_slice %arg4[%c4_i32_50, %c0_i32_51] : memref<8x256xf32, #tpu.memory_space<vmem>> -> memref<1x256xf32, #tpu.memory_space<vmem>>
    %75 = tpu.memref_slice %arg5[%c4_i32_48] : memref<8x!tpu.dma_semaphore, #tpu.memory_space<semaphore_mem>> -> memref<1x!tpu.dma_semaphore, #tpu.memory_space<semaphore_mem>>
    %76 = tpu.memref_squeeze %75 : memref<1x!tpu.dma_semaphore, #tpu.memory_space<semaphore_mem>> -> memref<!tpu.dma_semaphore, #tpu.memory_space<semaphore_mem>>
    tpu.wait_dma2 semaphore(%76 : memref<!tpu.dma_semaphore, #tpu.memory_space<semaphore_mem>>) src(%73 : memref<1x256xf32, #tpu.memory_space<any>>) dst(%74 : memref<1x256xf32, #tpu.memory_space<vmem>>)
    %c5_i32_52 = arith.constant 5 : i32
    %c0_i32_53 = arith.constant 0 : i32
    %77 = tpu.memref_slice %arg2[%38, %c0_i32_53] : memref<512x256xf32, #tpu.memory_space<any>> -> memref<1x256xf32, #tpu.memory_space<any>>
    %c5_i32_54 = arith.constant 5 : i32
    %c0_i32_55 = arith.constant 0 : i32
    %78 = tpu.memref_slice %arg4[%c5_i32_54, %c0_i32_55] : memref<8x256xf32, #tpu.memory_space<vmem>> -> memref<1x256xf32, #tpu.memory_space<vmem>>
    %79 = tpu.memref_slice %arg5[%c5_i32_52] : memref<8x!tpu.dma_semaphore, #tpu.memory_space<semaphore_mem>> -> memref<1x!tpu.dma_semaphore, #tpu.memory_space<semaphore_mem>>
    %80 = tpu.memref_squeeze %79 : memref<1x!tpu.dma_semaphore, #tpu.memory_space<semaphore_mem>> -> memref<!tpu.dma_semaphore, #tpu.memory_space<semaphore_mem>>
    tpu.wait_dma2 semaphore(%80 : memref<!tpu.dma_semaphore, #tpu.memory_space<semaphore_mem>>) src(%77 : memref<1x256xf32, #tpu.memory_space<any>>) dst(%78 : memref<1x256xf32, #tpu.memory_space<vmem>>)
    %c6_i32_56 = arith.constant 6 : i32
    %c0_i32_57 = arith.constant 0 : i32
    %81 = tpu.memref_slice %arg2[%45, %c0_i32_57] : memref<512x256xf32, #tpu.memory_space<any>> -> memref<1x256xf32, #tpu.memory_space<any>>
    %c6_i32_58 = arith.constant 6 : i32
    %c0_i32_59 = arith.constant 0 : i32
    %82 = tpu.memref_slice %arg4[%c6_i32_58, %c0_i32_59] : memref<8x256xf32, #tpu.memory_space<vmem>> -> memref<1x256xf32, #tpu.memory_space<vmem>>
    %83 = tpu.memref_slice %arg5[%c6_i32_56] : memref<8x!tpu.dma_semaphore, #tpu.memory_space<semaphore_mem>> -> memref<1x!tpu.dma_semaphore, #tpu.memory_space<semaphore_mem>>
    %84 = tpu.memref_squeeze %83 : memref<1x!tpu.dma_semaphore, #tpu.memory_space<semaphore_mem>> -> memref<!tpu.dma_semaphore, #tpu.memory_space<semaphore_mem>>
    tpu.wait_dma2 semaphore(%84 : memref<!tpu.dma_semaphore, #tpu.memory_space<semaphore_mem>>) src(%81 : memref<1x256xf32, #tpu.memory_space<any>>) dst(%82 : memref<1x256xf32, #tpu.memory_space<vmem>>)
    %c7_i32_60 = arith.constant 7 : i32
    %c0_i32_61 = arith.constant 0 : i32
    %85 = tpu.memref_slice %arg2[%52, %c0_i32_61] : memref<512x256xf32, #tpu.memory_space<any>> -> memref<1x256xf32, #tpu.memory_space<any>>
    %c7_i32_62 = arith.constant 7 : i32
    %c0_i32_63 = arith.constant 0 : i32
    %86 = tpu.memref_slice %arg4[%c7_i32_62, %c0_i32_63] : memref<8x256xf32, #tpu.memory_space<vmem>> -> memref<1x256xf32, #tpu.memory_space<vmem>>
    %87 = tpu.memref_slice %arg5[%c7_i32_60] : memref<8x!tpu.dma_semaphore, #tpu.memory_space<semaphore_mem>> -> memref<1x!tpu.dma_semaphore, #tpu.memory_space<semaphore_mem>>
    %88 = tpu.memref_squeeze %87 : memref<1x!tpu.dma_semaphore, #tpu.memory_space<semaphore_mem>> -> memref<!tpu.dma_semaphore, #tpu.memory_space<semaphore_mem>>
    tpu.wait_dma2 semaphore(%88 : memref<!tpu.dma_semaphore, #tpu.memory_space<semaphore_mem>>) src(%85 : memref<1x256xf32, #tpu.memory_space<any>>) dst(%86 : memref<1x256xf32, #tpu.memory_space<vmem>>)
    %c0 = arith.constant 0 : index
    %c0_64 = arith.constant 0 : index
    %89 = vector.load %arg4[%c0, %c0_64] : memref<8x256xf32, #tpu.memory_space<vmem>>, vector<8x256xf32>
    %c0_65 = arith.constant 0 : index
    %c0_66 = arith.constant 0 : index
    %90 = vector.load %arg3[%c0_65, %c0_66] : memref<8x256xf32, #tpu.memory_space<vmem>>, vector<8x256xf32>
    tpu.vector_store %arg3[%c0_65, %c0_66], %89 {strides = array<i32>} : memref<8x256xf32, #tpu.memory_space<vmem>>, vector<8x256xf32>,
    return
  }
  func.func @transform_1(%arg0: i32, %arg1: memref<16xi32, #tpu.memory_space<smem>>) -> (i32, i32) {
    %c0_i32 = arith.constant 0 : i32
    %c0_i32_0 = arith.constant 0 : i32
    return %arg0, %c0_i32 : i32, i32
  }
}

</mosaic_0001>

<llo_original>
// kernel: tpu_custom_call.1
$region0: #{tpu_custom_call.1}
  #allocation0 [shape = 'u32[]', space=smem, size = 0x4, offset = 0x4, fixed_abs, tag = 'smem constant byte address 0x4 - core index']
  #allocation1 [shape = 'u32[144,128]{1,0:T(1,128)}', space=vmem, size = 0x12000, scoped, tag = 'internal scratch']
  #allocation2 [shape = 'f32[8,256]{1,0:T(8,128)}', space=vmem, size = 0x2000, scoped, tag = 'scratch operand']
  #allocation3 [shape = 's32[8]{0}', space=sflag, size = 0x20, scoped, tag = 'scratch operand']
  #allocation4 [shape = 's32[1]{0}', space=sflag, size = 0x4, scoped, tag = 'scoped memory for tpu_custom_call.1']
  #allocation5 [shape = 'u8[512]{0}', space=smem, size = 0x200, scoped, tag = 'prefetched SMEM operand 0']
  #allocation8 [shape = 's32[]', space=sflag, size = 0x4, offset = 0, fixed_abs, tag = 'sflag constant byte address 0x0 - dummy sync flag']
  #allocation9 [shape = 's32[]', space=sflag, size = 0x4, offset = 0, fixed_abs, tag = 'sflag constant byte address 0x0 - dummy sync flag']
  #allocation10 [shape = 's32[]', space=sflag, size = 0x4, offset = 0, fixed_abs, tag = 'sflag constant byte address 0x0 - dummy sync flag']
  #allocation11 [shape = 's32[]', space=sflag, size = 0x4, offset = 0, fixed_abs, tag = 'sflag constant byte address 0x0 - dummy sync flag']
  #allocation12 [shape = 's32[]', space=sflag, size = 0x4, offset = 0, fixed_abs, tag = 'sflag constant byte address 0x0 - dummy sync flag']
  #allocation13 [shape = 's32[]', space=sflag, size = 0x4, offset = 0, fixed_abs, tag = 'sflag constant byte address 0x0 - dummy sync flag']
  #allocation14 [shape = 's32[]', space=sflag, size = 0x4, offset = 0, fixed_abs, tag = 'sflag constant byte address 0x0 - dummy sync flag']
  #allocation15 [shape = 's32[]', space=sflag, size = 0x4, offset = 0, fixed_abs, tag = 'sflag constant byte address 0x0 - dummy sync flag']
  %s0 = inlined_call_operand.hbm [shape: s32[16], index: 0, kind: input, shape index: {}]
  %s1 = inlined_call_operand.hbm [shape: f32[512,256], index: 1, kind: input, shape index: {}]
  %s2 = inlined_call_operand.hbm [shape: f32[16,256], index: 2, kind: output, shape index: {}]
  %s3 = sld [smem:[#allocation0]]
  $region25: #{tpu_custom_call.1} parent=0
    _
  %s5 = ssub.s32 1, %s3
  %s6 = scalar_select 0, %s5, %s3
  %8 = dma.hbm_to_smem %s0, 16, [#allocation5], [#allocation4]
  %9 = dma.done [#allocation4], 16
  %10 = sfence
  $region1: #{tpu_custom_call.1} parent=0
    #allocation6 [shape = 'u8[16384]{0}', space=vmem, size = 0x4000, scoped, tag = 'output window, operand 0']
    #allocation7 [shape = 's32[2]{0}', space=sflag, size = 0x8, scoped, tag = 'scoped memory for tpu_custom_call.1']
    %11 = vsyncpa [#allocation7], 0
    %s12 = scalar_lea.sflag [#allocation7], 1
    %13 = vsyncpa %s12, 0
    loop: start=0, step=1, limit=3
    $region2: #{tpu_custom_call.1} parent=1 // loop_pre_header
      _
    $region3: #{tpu_custom_call.1} parent=1 // loop_header
      %s15 = sphi 0, %s19
      %p16 = scmp.ge.s32.totalorder %s15, 3
      %s24 = sphi 0, %s26
      %s27 = sphi 0, %s24
      %s37 = sphi 0, %s27
    $region4: #{tpu_custom_call.1} parent=1 // loop_header_branch
      %18 = sbr.rel (%p16) target = $region8
    $region5: #{tpu_custom_call.1} parent=1 // loop_body
      %s20 = ssub.s32 %s15, 1
      %s21 = sadd.s32 %s15, 1
      %s22 = ssub.s32 %s15, %s21
      %p23 = scmp.eq.s32.totalorder %s22, 0
      %s25 = sadd.s32 %s24, 1
      %s26 = scalar_select %p23, %s24, %s25
      %p28 = pneg %p23
      %p29 = scmp.eq.s32.totalorder %s15, 1
      %p30 = por %p28, %p29
      %p31 = scmp.ne.s32.totalorder %s24, %s27
      %p32 = scmp.eq.s32.totalorder %s15, 0
      %p33 = por %p31, %p32
      %p34 = scmp.ne.s32.totalorder %s24, %s27
      %p35 = scmp.eq.s32.totalorder %s20, 1
      %p36 = por %p34, %p35
      %p38 = scmp.ne.s32.totalorder %s27, %s37
      %p39 = scmp.eq.s32.totalorder %s20, 0
      %p40 = por %p38, %p39
      %p41 = scmp.lt.s32.totalorder %s15, 2
      // Predicated region
      $region9: #{tpu_custom_call.1} parent=5 // pred_check
        %p42 = pneg %p41
      $region10: #{tpu_custom_call.1} parent=5 // pred_check_branch
        %44 = sbr.rel (%p42) target = $region12
      $region11: #{tpu_custom_call.1} parent=5 // pred_region
        %p45 = pneg %p33
        %p46 = pneg %p30
        %s47 = sand.u32 %s24, 1
        %s48 = scalar_lea.sflag [#allocation7], %s47
        %s49 = sand.u32 %s24, 1
        %s50 = smul.addr %s49, 16
        %s51 = scalar_lea.vmem [#allocation6], %s50
        %s52 = smul.u32 %s15, 8
        %s53 = sld [smem:[#allocation5 + %s52]]
        %s54 = sshrl.u32 %s53, 3
        %s55 = sand.u32 %s53, 7
        %s56 = smul.u32 %s54, 16
        %s57 = sadd.s32 %s55, %s56
        %s58 = smul.addr %s57, 16
        %s59 = scalar_lea.hbm %s1, %s58
        %s61 = sshll.u32 [#allocation2], 4
        %s62 = int_to_ptr.vmem [resolvable:$true] %s61
        %64 = dma.hbm_to_vmem [thread:$0]  %s59, 32, %s62, [#allocation3], 128, 128, 1
        %s65 = sadd.s32 %s52, 1
        %s66 = sld [smem:[#allocation5 + %s65]]
        %s67 = sshrl.u32 %s66, 3
        %s68 = sand.u32 %s66, 7
        %s69 = smul.u32 %s67, 16
        %s70 = sadd.s32 %s68, %s69
        %s71 = smul.addr %s70, 16
        %s72 = scalar_lea.hbm %s1, %s71
        %s73 = scalar_lea.vmem [#allocation2], 1
        %s74 = scalar_lea.sflag [#allocation3], 1
        %s76 = sshll.u32 %s73, 4
        %s77 = int_to_ptr.vmem [resolvable:$true] %s76
        %79 = dma.hbm_to_vmem [thread:$0]  %s72, 32, %s77, %s74, 128, 128, 1
        %s80 = sadd.s32 %s52, 2
        %s81 = sld [smem:[#allocation5 + %s80]]
        %s82 = sshrl.u32 %s81, 3
        %s83 = sand.u32 %s81, 7
        %s84 = smul.u32 %s82, 16
        %s85 = sadd.s32 %s83, %s84
        %s86 = smul.addr %s85, 16
        %s87 = scalar_lea.hbm %s1, %s86
        %s88 = scalar_lea.vmem [#allocation2], 2
        %s89 = scalar_lea.sflag [#allocation3], 2
        %s91 = sshll.u32 %s88, 4
        %s92 = int_to_ptr.vmem [resolvable:$true] %s91
        %94 = dma.hbm_to_vmem [thread:$0]  %s87, 32, %s92, %s89, 128, 128, 1
        %s95 = sadd.s32 %s52, 3
        %s96 = sld [smem:[#allocation5 + %s95]]
        %s97 = sshrl.u32 %s96, 3
        %s98 = sand.u32 %s96, 7
        %s99 = smul.u32 %s97, 16
        %s100 = sadd.s32 %s98, %s99
        %s101 = smul.addr %s100, 16
        %s102 = scalar_lea.hbm %s1, %s101
        %s103 = scalar_lea.vmem [#allocation2], 3
        %s104 = scalar_lea.sflag [#allocation3], 3
        %s106 = sshll.u32 %s103, 4
        %s107 = int_to_ptr.vmem [resolvable:$true] %s106
        %109 = dma.hbm_to_vmem [thread:$0]  %s102, 32, %s107, %s104, 128, 128, 1
        %s110 = sadd.s32 %s52, 4
        %s111 = sld [smem:[#allocation5 + %s110]]
        %s112 = sshrl.u32 %s111, 3
        %s113 = sand.u32 %s111, 7
        %s114 = smul.u32 %s112, 16
        %s115 = sadd.s32 %s113, %s114
        %s116 = smul.addr %s115, 16
        %s117 = scalar_lea.hbm %s1, %s116
        %s118 = scalar_lea.vmem [#allocation2], 4
        %s119 = scalar_lea.sflag [#allocation3], 4
        %s121 = sshll.u32 %s118, 4
        %s122 = int_to_ptr.vmem [resolvable:$true] %s121
        %124 = dma.hbm_to_vmem [thread:$0]  %s117, 32, %s122, %s119, 128, 128, 1
        %s125 = sadd.s32 %s52, 5
        %s126 = sld [smem:[#allocation5 + %s125]]
        %s127 = sshrl.u32 %s126, 3
        %s128 = sand.u32 %s126, 7
        %s129 = smul.u32 %s127, 16
        %s130 = sadd.s32 %s128, %s129
        %s131 = smul.addr %s130, 16
        %s132 = scalar_lea.hbm %s1, %s131
        %s133 = scalar_lea.vmem [#allocation2], 5
        %s134 = scalar_lea.sflag [#allocation3], 5
        %s136 = sshll.u32 %s133, 4
        %s137 = int_to_ptr.vmem [resolvable:$true] %s136
        %139 = dma.hbm_to_vmem [thread:$0]  %s132, 32, %s137, %s134, 128, 128, 1
        %s140 = sadd.s32 %s52, 6
        %s141 = sld [smem:[#allocation5 + %s140]]
        %s142 = sshrl.u32 %s141, 3
        %s143 = sand.u32 %s141, 7
        %s144 = smul.u32 %s142, 16
        %s145 = sadd.s32 %s143, %s144
        %s146 = smul.addr %s145, 16
        %s147 = scalar_lea.hbm %s1, %s146
        %s148 = scalar_lea.vmem [#allocation2], 6
        %s149 = scalar_lea.sflag [#allocation3], 6
        %s151 = sshll.u32 %s148, 4
        %s152 = int_to_ptr.vmem [resolvable:$true] %s151
        %154 = dma.hbm_to_vmem [thread:$0]  %s147, 32, %s152, %s149, 128, 128, 1
        %s155 = sadd.s32 %s52, 7
        %s156 = sld [smem:[#allocation5 + %s155]]
        %s157 = sshrl.u32 %s156, 3
        %s158 = sand.u32 %s156, 7
        %s159 = smul.u32 %s157, 16
        %s160 = sadd.s32 %s158, %s159
        %s161 = smul.addr %s160, 16
        %s162 = scalar_lea.hbm %s1, %s161
        %s163 = scalar_lea.vmem [#allocation2], 7
        %s164 = scalar_lea.sflag [#allocation3], 7
        %s166 = sshll.u32 %s163, 4
        %s167 = int_to_ptr.vmem [resolvable:$true] %s166
        %169 = dma.hbm_to_vmem [thread:$0]  %s162, 32, %s167, %s164, 128, 128, 1
        %s170 = smul.u32 1, 2
        %s171 = sshll.u32 %s170, 4
        %172 = dma.done [#allocation3], %s171
        %s173 = sshll.u32 %s170, 4
        %174 = dma.done %s74, %s173
        %s175 = sshll.u32 %s170, 4
        %176 = dma.done %s89, %s175
        %s177 = sshll.u32 %s170, 4
        %178 = dma.done %s104, %s177
        %s179 = sshll.u32 %s170, 4
        %180 = dma.done %s119, %s179
        %s181 = sshll.u32 %s170, 4
        %182 = dma.done %s134, %s181
        %s183 = sshll.u32 %s170, 4
        %184 = dma.done %s149, %s183
        %s185 = sshll.u32 %s170, 4
        %186 = dma.done %s164, %s185
        %v187 = vld [vmem:[#allocation2] sm:$0xff]
        %v188 = vld [vmem:[#allocation2 + $0x8] sm:$0xff]
        %189 = vst [vmem:[%s51] sm:$0xff] %v187
        %190 = vst [vmem:[%s51 + $0x8] sm:$0xff] %v188
        %s191 = sand.u32 %s24, 1
        %s192 = scalar_lea.sflag [#allocation7], %s191
        %s193 = sand.u32 %s24, 1
        %s194 = smul.addr %s193, 16
        %s195 = scalar_lea.vmem [#allocation6], %s194
        // Predicated region
        $region13: #{tpu_custom_call.1} parent=11 // pred_check
          %p196 = pneg %p30
        $region14: #{tpu_custom_call.1} parent=11 // pred_check_branch
          %198 = sbr.rel (%p196) target = $region16
        $region15: #{tpu_custom_call.1} parent=11 // pred_region
          %s200 = ssub.s32 256, 256
          %201 = vsyncadd %s192, %s200
          %s202 = smul.addr %s15, 2
          %s203 = smul.addr %s202, 128
          %s204 = scalar_lea.hbm %s2, %s203
          %s206 = sshll.u32 %s195, 4
          %s207 = int_to_ptr.vmem [resolvable:$true] %s206
          %209 = dma.vmem_to_hbm [thread:$0]  %s207, 256, %s204, %s192
        $region16: #{tpu_custom_call.1} parent=11 // pred_fallthru
          _
      $region12: #{tpu_custom_call.1} parent=5 // pred_fallthru
        _
      %p210 = scmp.le.s32.totalorder 1, %s15
      // Predicated region
      $region17: #{tpu_custom_call.1} parent=5 // pred_check
        %p211 = pneg %p210
      $region18: #{tpu_custom_call.1} parent=5 // pred_check_branch
        %213 = sbr.rel (%p211) target = $region20
      $region19: #{tpu_custom_call.1} parent=5 // pred_region
        %s214 = ssub.s32 %s15, 1
        // Predicated region
        $region21: #{tpu_custom_call.1} parent=19 // pred_check
          %p215 = pneg %p36
        $region22: #{tpu_custom_call.1} parent=19 // pred_check_branch
          %217 = sbr.rel (%p215) target = $region24
        $region23: #{tpu_custom_call.1} parent=19 // pred_region
          %s218 = sand.u32 %s27, 1
          %s219 = scalar_lea.sflag [#allocation7], %s218
          %s220 = sand.u32 %s27, 1
          %s221 = smul.addr %s220, 16
          %s222 = scalar_lea.vmem [#allocation6], %s221
          %223 = dma.done %s219, 256
        $region24: #{tpu_custom_call.1} parent=19 // pred_fallthru
          _
      $region20: #{tpu_custom_call.1} parent=5 // pred_fallthru
        _
    $region6: #{tpu_custom_call.1} parent=1 // loop_footer
      %s19 = sadd.s32 1, %s15
    $region7: #{tpu_custom_call.1} parent=1 // loop_footer_branch
      %14 = sbr.rel target = $region3
    $region8: #{tpu_custom_call.1} parent=1 // loop_exit
      _
    %224 = vsyncpa [#allocation7], 1
    %s225 = scalar_lea.sflag [#allocation7], 1
    %226 = vsyncpa %s225, 1
  %227 = vsyncmov [#allocation3]
  %s228 = vpop.sfrf %227
  %p229 = scmp.eq.s32.totalorder %s228, 0
  %p230 = pneg %p229
  %232 = shalt.err (%p230)
  %s233 = scalar_lea.sflag [#allocation3], 1
  %234 = vsyncmov %s233
  %s235 = vpop.sfrf %234
  %p236 = scmp.eq.s32.totalorder %s235, 0
  %p237 = pneg %p236
  %239 = shalt.err (%p237)
  %s240 = scalar_lea.sflag [#allocation3], 2
  %241 = vsyncmov %s240
  %s242 = vpop.sfrf %241
  %p243 = scmp.eq.s32.totalorder %s242, 0
  %p244 = pneg %p243
  %246 = shalt.err (%p244)
  %s247 = scalar_lea.sflag [#allocation3], 3
  %248 = vsyncmov %s247
  %s249 = vpop.sfrf %248
  %p250 = scmp.eq.s32.totalorder %s249, 0
  %p251 = pneg %p250
  %253 = shalt.err (%p251)
  %s254 = scalar_lea.sflag [#allocation3], 4
  %255 = vsyncmov %s254
  %s256 = vpop.sfrf %255
  %p257 = scmp.eq.s32.totalorder %s256, 0
  %p258 = pneg %p257
  %260 = shalt.err (%p258)
  %s261 = scalar_lea.sflag [#allocation3], 5
  %262 = vsyncmov %s261
  %s263 = vpop.sfrf %262
  %p264 = scmp.eq.s32.totalorder %s263, 0
  %p265 = pneg %p264
  %267 = shalt.err (%p265)
  %s268 = scalar_lea.sflag [#allocation3], 6
  %269 = vsyncmov %s268
  %s270 = vpop.sfrf %269
  %p271 = scmp.eq.s32.totalorder %s270, 0
  %p272 = pneg %p271
  %274 = shalt.err (%p272)
  %s275 = scalar_lea.sflag [#allocation3], 7
  %276 = vsyncmov %s275
  %s277 = vpop.sfrf %276
  %p278 = scmp.eq.s32.totalorder %s277, 0
  %p279 = pneg %p278
  %281 = shalt.err (%p279)

</llo_original>
